<compile_context>
chip_gen: v7x
topology: tpu7x:2x2x1
jax: 0.10.0
libtpu: 0.0.40
codegen_flags: <defaults>
</compile_context>

<pallas_src>
import functools
import math

import jax
import jax.numpy as jnp
from jax.experimental import pallas as pl
from jax.experimental.pallas import tpu as pltpu


def _xlogx(v):
    # KLDivLoss convention: 0 * log(0) := 0
    return float(v) * math.log(v) if v > 0.0 else 0.0


def _label_smoothing_kernel(x_ref, tgt_ref, out_ref, *,
                            base, confidence, c_base, c_conf,
                            padding_idx, size, v_padded):
    # x_ref:   (TN, Vp)   log-probs (any float dtype), upcast to f32 here
    # tgt_ref: (TN, 1)    int32 target class per row
    # out_ref: (1, 1, Vp) f32 lane-dense partial sums for this row block
    x = x_ref[...].astype(jnp.float32)
    tgt = tgt_ref[...]                                    # (TN, 1)
    tn, vp = x.shape

    col = jax.lax.broadcasted_iota(jnp.int32, (tn, vp), 1)
    is_tgt = col == tgt

    # td * (log(td) - x) with log constant-folded: td in {confidence, base}.
    coef = jnp.where(is_tgt, jnp.float32(confidence), jnp.float32(base))
    const = jnp.where(is_tgt, jnp.float32(c_conf), jnp.float32(c_base))
    contrib = const - coef * x

    # Zero: padding column, padded (out-of-vocab) columns, rows whose target is padding.
    zero = (col == padding_idx) | (tgt == padding_idx)
    if v_padded > size:
        zero = zero | (col >= size)
    contrib = jnp.where(zero, 0.0, contrib)

    # Row (sublane) reduce only; lanes stay live.  The single cross-lane reduce
    # over the small (num_blocks, 1, Vp) partials happens in the wrapper.
    out_ref[...] = jnp.sum(contrib, axis=0, keepdims=True).reshape(1, 1, vp)


def label_smoothing_loss(x, target, *, size, padding_idx, smoothing=0.0,
                         row_tile=None,
                         block_bytes=6 * 1024 * 1024,
                         vmem_limit_bytes=40 * 1024 * 1024):
    """Pallas implementation of LabelSmoothing.forward. Returns scalar loss (sum)."""
    assert x.ndim == 2 and x.shape[1] == size
    assert size > 2, "label smoothing divides by (size - 2); need size > 2"
    n, _ = x.shape

    confidence = 1.0 - float(smoothing)
    base = float(smoothing) / (size - 2)
    c_conf = _xlogx(confidence)
    c_base = _xlogx(base)

    # Lane-dense class axis: pad to a multiple of 128.
    vp = max(128, ((size + 127) // 128) * 128)

    # Largest row tile (multiple of 8) whose x block fits the per-buffer VMEM budget.
    if row_tile is None:
        itemsize = jnp.dtype(x.dtype).itemsize
        max_rows = max(8, (block_bytes // (vp * itemsize)) // 8 * 8)
        row_tile = int(min(max_rows, max(8, ((n + 7) // 8) * 8), 1024))
    # TODO(synk): for extremely large vocabularies where even an 8-row block blows the
    # budget, add a second "arbitrary" grid axis over the class dimension.

    n_pad = ((n + row_tile - 1) // row_tile) * row_tile
    num_blocks = n_pad // row_tile

    # Padded rows get target == padding_idx so they contribute exactly 0;
    # padded class columns are masked inside the kernel.
    x_p = x
    if vp != size or n_pad != n:
        x_p = jnp.pad(x, ((0, n_pad - n), (0, vp - size)))
    tgt_p = jnp.pad(target.astype(jnp.int32), (0, n_pad - n),
                    constant_values=int(padding_idx)).reshape(n_pad, 1)

    kernel = functools.partial(
        _label_smoothing_kernel,
        base=base, confidence=confidence, c_base=c_base, c_conf=c_conf,
        padding_idx=int(padding_idx), size=int(size), v_padded=int(vp))

    partials = pl.pallas_call(
        kernel,
        out_shape=jax.ShapeDtypeStruct((num_blocks, 1, vp), jnp.float32),
        grid_spec=pltpu.PrefetchScalarGridSpec(
            num_scalar_prefetch=0,
            grid=(num_blocks,),
            in_specs=[
                pl.BlockSpec((row_tile, vp), lambda i: (i, 0)),
                pl.BlockSpec((row_tile, 1), lambda i: (i, 0)),
            ],
            out_specs=pl.BlockSpec((1, 1, vp), lambda i: (i, 0, 0)),
        ),
        compiler_params=pltpu.CompilerParams(
            dimension_semantics=("parallel",),
            vmem_limit_bytes=int(vmem_limit_bytes)),
    )(x_p, tgt_p)

    return jnp.sum(partials)


def _reference_loss(x, target, *, size, padding_idx, smoothing):
    """Pure-JAX reference mirroring the PyTorch module."""
    n, v = x.shape
    confidence = 1.0 - smoothing
    col = jnp.arange(v)[None, :]
    tgt = target[:, None]
    td = jnp.where(col == tgt, confidence, smoothing / (size - 2))
    td = jnp.where(col == padding_idx, 0.0, td)
    td = jnp.where(tgt == padding_idx, 0.0, td)
    contrib = jnp.where(td > 0, td * (jnp.log(jnp.where(td > 0, td, 1.0)) - x), 0.0)
    return jnp.sum(contrib)


if __name__ == "__main__":
    key = jax.random.PRNGKey(0)

    # --- Test 1: basic, V already small (exercises V padding to 128) ---
    N, V = 8, 32
    padding_idx, smoothing = 0, 0.1
    kx, kt = jax.random.split(key)
    logits = jax.random.normal(kx, (N, V), dtype=jnp.float32)
    x = jax.nn.log_softmax(logits, axis=-1)
    target = jax.random.randint(kt, (N,), 0, V, dtype=jnp.int32)
    target = target.at[3].set(padding_idx)                 # exercise row-zeroing

    loss = jax.block_until_ready(
        label_smoothing_loss(x, target, size=V, padding_idx=padding_idx,
                             smoothing=smoothing))
    ref = _reference_loss(x, target, size=V, padding_idx=padding_idx,
                          smoothing=smoothing)
    assert jnp.allclose(loss, ref, rtol=1e-5, atol=1e-5), (loss, ref)

    # --- Test 2: N and V both need padding, different padding_idx, bf16 input ---
    N2, V2 = 10, 50
    padding_idx2, smoothing2 = 1, 0.2
    k1, k2 = jax.random.split(kt)
    x2 = jax.nn.log_softmax(jax.random.normal(k1, (N2, V2), jnp.float32), axis=-1)
    x2_bf16 = x2.astype(jnp.bfloat16)
    target2 = jax.random.randint(k2, (N2,), 0, V2, dtype=jnp.int32)
    target2 = target2.at[0].set(padding_idx2).at[7].set(padding_idx2)

    loss2 = jax.block_until_ready(
        label_smoothing_loss(x2_bf16, target2, size=V2, padding_idx=padding_idx2,
                             smoothing=smoothing2))
    ref2 = _reference_loss(x2_bf16.astype(jnp.float32), target2, size=V2,
                           padding_idx=padding_idx2, smoothing=smoothing2)
    assert jnp.allclose(loss2, ref2, rtol=1e-5, atol=1e-5), (loss2, ref2)

    # --- Test 3: smoothing = 0 (base == 0 path, no log hazard) ---
    loss3 = jax.block_until_ready(
        label_smoothing_loss(x, target, size=V, padding_idx=padding_idx,
                             smoothing=0.0))
    ref3 = _reference_loss(x, target, size=V, padding_idx=padding_idx,
                           smoothing=0.0)
    assert jnp.allclose(loss3, ref3, rtol=1e-5, atol=1e-5), (loss3, ref3)

    print("KERNEL_OK")
</pallas_src>

<mosaic_0001>
module attributes {stable_mosaic.version = 11 : i64} {
  func.func @_label_smoothing_kernel(%arg0: i32, %arg1: memref<8x128xf32, #tpu.memory_space<vmem>>, %arg2: memref<8x1xi32, #tpu.memory_space<vmem>>, %arg3: memref<1x1x128xf32, #tpu.memory_space<vmem>>) attributes {dimension_semantics = [#tpu.dimension_semantics<parallel>], iteration_bounds = array<i64: 1>, scalar_prefetch = 0 : i64, scratch_operands = 0 : i64, tpu.core_type = #tpu.core_type<tc>, window_params = [{transform_indices = @transform_0, window_bounds = array<i64: 8, 128>}, {transform_indices = @transform_1, window_bounds = array<i64: 8, 1>}, {transform_indices = @transform_2, window_bounds = array<i64: 1, 1, 128>}]} {
    %c0 = arith.constant 0 : index
    %c0_0 = arith.constant 0 : index
    %0 = vector.load %arg1[%c0, %c0_0] : memref<8x128xf32, #tpu.memory_space<vmem>>, vector<8x128xf32>
    %c0_1 = arith.constant 0 : index
    %c0_2 = arith.constant 0 : index
    %1 = vector.load %arg2[%c0_1, %c0_2] : memref<8x1xi32, #tpu.memory_space<vmem>>, vector<8x1xi32>
    %2 = tpu.iota {dimensions = array<i32: 1>} : vector<8x128xi32>
    %3 = vector.broadcast %1 : vector<8x1xi32> to vector<8x128xi32>
    %4 = arith.cmpi eq, %2, %3 : vector<8x128xi32>
    %cst = arith.constant 0.899999976 : f32
    %cst_3 = arith.constant 0.00333333341 : f32
    %5 = vector.broadcast %cst : f32 to vector<8x128xf32>
    %6 = vector.broadcast %cst_3 : f32 to vector<8x128xf32>
    %7 = arith.select %4, %5, %6 : vector<8x128xi1>, vector<8x128xf32>
    %cst_4 = arith.constant -0.0948244631 : f32
    %cst_5 = arith.constant -0.0190126076 : f32
    %8 = vector.broadcast %cst_4 : f32 to vector<8x128xf32>
    %9 = vector.broadcast %cst_5 : f32 to vector<8x128xf32>
    %10 = arith.select %4, %8, %9 : vector<8x128xi1>, vector<8x128xf32>
    %11 = arith.mulf %7, %0 : vector<8x128xf32>
    %12 = arith.subf %10, %11 : vector<8x128xf32>
    %c0_i32 = arith.constant 0 : i32
    %13 = vector.broadcast %c0_i32 : i32 to vector<8x128xi32>
    %14 = arith.cmpi eq, %2, %13 : vector<8x128xi32>
    %c0_i32_6 = arith.constant 0 : i32
    %15 = vector.broadcast %c0_i32_6 : i32 to vector<8x1xi32>
    %16 = arith.cmpi eq, %1, %15 : vector<8x1xi32>
    %17 = vector.broadcast %16 : vector<8x1xi1> to vector<8x128xi1>
    %18 = arith.ori %14, %17 : vector<8x128xi1>
    %c32_i32 = arith.constant 32 : i32
    %19 = vector.broadcast %c32_i32 : i32 to vector<8x128xi32>
    %20 = arith.cmpi sge, %2, %19 : vector<8x128xi32>
    %21 = arith.ori %18, %20 : vector<8x128xi1>
    %cst_7 = arith.constant 0.000000e+00 : f32
    %22 = vector.broadcast %cst_7 : f32 to vector<8x128xf32>
    %23 = arith.select %21, %22, %12 : vector<8x128xi1>, vector<8x128xf32>
    %cst_8 = arith.constant dense<0.000000e+00> : vector<128xf32>
    %24 = vector.multi_reduction <add>, %23, %cst_8 [0] : vector<8x128xf32> to vector<128xf32>
    %25 = vector.shape_cast %24 : vector<128xf32> to vector<1x128xf32>
    %26 = vector.shape_cast %25 : vector<1x128xf32> to vector<1x1x128xf32>
    %c0_9 = arith.constant 0 : index
    %c0_10 = arith.constant 0 : index
    %c0_11 = arith.constant 0 : index
    %27 = vector.load %arg3[%c0_9, %c0_10, %c0_11] : memref<1x1x128xf32, #tpu.memory_space<vmem>>, vector<1x1x128xf32>
    tpu.vector_store %arg3[%c0_9, %c0_10, %c0_11], %26 {strides = array<i32>} : memref<1x1x128xf32, #tpu.memory_space<vmem>>, vector<1x1x128xf32>,
    return
  }
  func.func @transform_0(%arg0: i32) -> (i32, i32) {
    %c0_i32 = arith.constant 0 : i32
    %c0_i32_0 = arith.constant 0 : i32
    return %arg0, %c0_i32 : i32, i32
  }
  func.func @transform_1(%arg0: i32) -> (i32, i32) {
    %c0_i32 = arith.constant 0 : i32
    %c0_i32_0 = arith.constant 0 : i32
    return %arg0, %c0_i32 : i32, i32
  }
  func.func @transform_2(%arg0: i32) -> (i32, i32, i32) {
    %c0_i32 = arith.constant 0 : i32
    %c0_i32_0 = arith.constant 0 : i32
    %c0_i32_1 = arith.constant 0 : i32
    return %arg0, %c0_i32, %c0_i32_0 : i32, i32, i32
  }
}

</mosaic_0001>

<llo_original>
// kernel: tpu_custom_call.1
$region0: #{tpu_custom_call.1}
  #allocation0 [shape = 'u32[]', space=smem, size = 0x4, offset = 0x4, fixed_abs, tag = 'smem constant byte address 0x4 - core index']
  #allocation1 [shape = 'u32[144,128]{1,0:T(1,128)}', space=vmem, size = 0x12000, scoped, tag = 'internal scratch']
  %s0 = inlined_call_operand.vmem [shape: f32[8,128], index: 0, kind: input, shape index: {}]
  %s1 = inlined_call_operand.vmem [shape: s32[8,1], index: 1, kind: input, shape index: {}]
  %s2 = inlined_call_operand.hbm [shape: f32[1,1,128], index: 2, kind: output, shape index: {}]
  %s3 = sld [smem:[#allocation0]]
  $region18: #{tpu_custom_call.1} parent=0
    _
  %s5 = ssub.s32 1, %s3
  %s6 = scalar_select 0, %s5, %s3
  $region1: #{tpu_custom_call.1} parent=0
    #allocation2 [shape = 'u8[512]{0}', space=vmem, size = 0x400, scoped, tag = 'output window, operand 0, single buffered']
    #allocation3 [shape = 's32[1]{0}', space=sflag, size = 0x4, scoped, tag = 'scoped memory for tpu_custom_call.1']
    %7 = vsyncpa [#allocation3], 0
    // Predicated region
    $region2: #{tpu_custom_call.1} parent=1 // pred_check
      _
    $region3: #{tpu_custom_call.1} parent=1 // pred_check_branch
      %9 = sbr.rel (0) target = $region5
    $region4: #{tpu_custom_call.1} parent=1 // pred_region
      _
    $region5: #{tpu_custom_call.1} parent=1 // pred_fallthru
      _
    // Predicated region
    $region6: #{tpu_custom_call.1} parent=1 // pred_check
      _
    $region7: #{tpu_custom_call.1} parent=1 // pred_check_branch
      %11 = sbr.rel (0) target = $region9
    $region8: #{tpu_custom_call.1} parent=1 // pred_region
      _
    $region9: #{tpu_custom_call.1} parent=1 // pred_fallthru
      _
    %v12 = vld [vmem:[%s0] sm:$0xff]
    %v13 = vld [vmem:[%s1] sm:$0xff]
    %v14 = vlaneseq
    %v15 = vand.u32 %v14, 127
    %16 = vset.pattern.permute.xlu0 0
    %17 = vperm.xlu0 %16, %v13
    %v18 = vpop.permute.xlu0 %17
    %vm19 = vcmp.eq.s32.totalorder %v15, %v18
    %v20 = vsel %vm19, 0.9, 0.0033333334
    %v21 = vsel %vm19, -0.09482446, -0.019012608
    %v22 = vmul.f32 %v20, %v12
    %v23 = vsub.f32 %v21, %v22
    %vm24 = vcmp.eq.s32.totalorder %v15, 0
    %vm25 = vcmp.eq.s32.totalorder %v13, 0
    %v26 = vsel %vm25, 1, 0
    %27 = vset.pattern.permute.xlu0 0
    %28 = vperm.xlu0 %27, %v26
    %v29 = vpop.permute.xlu0 %28
    %vm30 = vcmp.eq.s32.totalorder %v29, 1
    %vm31 = vmor %vm24, %vm30
    %vm32 = vcmp.ge.s32.totalorder %v15, 32
    %vm33 = vmor %vm31, %vm32
    %v34 = vsel %vm33, 0.0, %v23
    %v35 = vrot.slane %v34, 4
    %v36 = vadd.f32 %v34, %v35
    %v37 = vrot.slane %v36, 2
    %v38 = vadd.f32 %v36, %v37
    %v39 = vrot.slane %v38, 1
    %v40 = vadd.f32 %v38, %v39
    %41 = vst [vmem:[#allocation2] sm:$0x1] %v40
    // Predicated region
    $region10: #{tpu_custom_call.1} parent=1 // pred_check
      _
    $region11: #{tpu_custom_call.1} parent=1 // pred_check_branch
      %43 = sbr.rel (0) target = $region13
    $region12: #{tpu_custom_call.1} parent=1 // pred_region
      %s45 = ssub.s32 16, 16
      %46 = vsyncadd [#allocation3], %s45
      %s48 = sshll.u32 [#allocation2], 4
      %s49 = int_to_ptr.vmem [resolvable:$true] %s48
      %51 = dma.vmem_to_hbm [thread:$0]  %s49, 16, %s2, [#allocation3]
    $region13: #{tpu_custom_call.1} parent=1 // pred_fallthru
      _
    // Predicated region
    $region14: #{tpu_custom_call.1} parent=1 // pred_check
      _
    $region15: #{tpu_custom_call.1} parent=1 // pred_check_branch
      %53 = sbr.rel (0) target = $region17
    $region16: #{tpu_custom_call.1} parent=1 // pred_region
      %54 = dma.done [#allocation3], 16
    $region17: #{tpu_custom_call.1} parent=1 // pred_fallthru
      _
    %55 = vsyncpa [#allocation3], 1

</llo_original>
